<compile_context>
chip_gen: v7x
topology: tpu7x:2x2x1
jax: 0.10.0
libtpu: 0.0.40
codegen_flags: <defaults>
</compile_context>

<pallas_src>
import jax
import jax.numpy as jnp
from jax import lax
from jax.experimental import pallas as pl
from jax.experimental.pallas import tpu as pltpu


# ---------------------------------------------------------------------------
# Kernel
# ---------------------------------------------------------------------------
def mlp_kernel(x_ref, w1_ref, b1_ref, w2_ref, b2_ref, o_ref):
    # x_ref : (TB, D) f32  — natural row-major block of x (one contiguous DMA)
    # w1_ref: (H, D)  bf16 — resident first-layer weight
    # b1_ref: (H, 1)  f32  — resident first-layer bias
    # w2_ref: (H, 1)  f32  — resident second-layer weight (as a column)
    # b2_ref: (1,)    f32  — scalar bias in SMEM
    # o_ref : (1, TB) f32  — lane-dense output (batch on the lane axis)
    x = x_ref[...].astype(jnp.bfloat16)  # VPU cast; keeps the MXU on the bf16 path
    # Layer 1: h^T = W1 @ x^T (contract over D) on the MXU, f32 accumulation.
    # Result (H, TB) puts the batch on lanes.
    h = lax.dot_general(
        w1_ref[...], x,
        dimension_numbers=(((1,), (1,)), ((), ())),
        preferred_element_type=jnp.float32,
    )
    h = jnp.maximum(h + b1_ref[...], 0.0)                              # bias + ReLU (VPU)
    # Layer 2 (32 -> 1): VPU multiply + sublane (XLU) reduce, scalar bias from SMEM.
    z = jnp.sum(h * w2_ref[...], axis=0, keepdims=True) + b2_ref[0]    # (1, TB)
    # Exact sigmoid: EUP exp + exact reciprocal (stays strictly within [0, 1]).
    o_ref[...] = 1.0 / (1.0 + jnp.exp(-z))


# ---------------------------------------------------------------------------
# Tiling
# ---------------------------------------------------------------------------
_MIN_ROWS_PER_CORE = 4096              # don't split small batches across v7x cores
_VMEM_TILE_BUDGET = 10 * 1024 * 1024   # per-step working-set budget (v5e/v7x safe)


def _round_up(n, m):
    return pl.cdiv(n, m) * m


def _batch_tiling(B, D, H, max_batch_tile):
    """Pick (TB, num_blocks) for the batch grid.

    TB comes from a D-aware VMEM budget: 2 double-buffered f32 x blocks, the
    in-kernel bf16 copy of x, the f32 hidden activations h and 2 double-buffered
    f32 output blocks.  Large enough to amortize the ~0.35 us per-grid-step cost,
    small enough for v5e's 16 MiB scoped VMEM / v7x's 64 MiB physical VMEM.
    """
    per_col = 2 * D * 4 + D * 2 + H * 4 + 2 * 4
    tb_max = _VMEM_TILE_BUDGET // per_col
    tb_max = min(tb_max, max_batch_tile)
    tb_max = max(128, (tb_max // 128) * 128)
    # TODO(synk): for very large input_dim, add a D (reduction) grid axis with an
    # f32 accumulator instead of loading full-D rows, to keep v7x VMEM bounded.

    if B <= tb_max and B < 2 * _MIN_ROWS_PER_CORE:
        return B, 1                                    # one full-extent block
    n_blocks = pl.cdiv(B, tb_max)
    if B >= 2 * _MIN_ROWS_PER_CORE:
        n_blocks = max(n_blocks, 2)                    # keep both v7x cores busy
    tb = _round_up(pl.cdiv(B, n_blocks), 128)
    return tb, pl.cdiv(B, tb)                          # last block may be partial


# ---------------------------------------------------------------------------
# Forward pass
# ---------------------------------------------------------------------------
def mlp_forward(x, w1, b1, w2, b2, *, max_batch_tile=32768):
    """Forward pass of MLPClassifierModel.

    Args (PyTorch layouts):
      x : (B, D) float32
      w1: (H, D) float32, b1: (H,) float32        -- Linear(input_dim, 32)
      w2: (1, H) float32, b2: (1,) float32        -- Linear(32, 1)
    Returns:
      (B, 1) float32 sigmoid probabilities.
    """
    B, D = x.shape
    H = w1.shape[0]
    TB, grid_b = _batch_tiling(B, D, H, max_batch_tile)

    # Tiny host-side prep only on the resident weights (H*D elements).
    w1_k = w1.astype(jnp.bfloat16)                    # (H, D)
    b1_k = b1.reshape(H, 1).astype(jnp.float32)       # (H, 1)
    w2_k = w2.reshape(H, 1).astype(jnp.float32)       # (H, 1) column
    b2_k = b2.reshape(1).astype(jnp.float32)          # scalar -> SMEM

    out_t = pl.pallas_call(
        mlp_kernel,
        out_shape=jax.ShapeDtypeStruct((1, B), jnp.float32),
        grid=(grid_b,),
        in_specs=[
            pl.BlockSpec((TB, D), lambda i: (i, 0)),            # x streamed, natural layout
            pl.BlockSpec((H, D), lambda i: (0, 0)),             # W1 resident
            pl.BlockSpec((H, 1), lambda i: (0, 0)),             # b1 resident
            pl.BlockSpec((H, 1), lambda i: (0, 0)),             # w2 column resident
            pl.BlockSpec(memory_space=pltpu.MemorySpace.SMEM),  # b2 scalar
        ],
        out_specs=pl.BlockSpec((1, TB), lambda i: (0, i)),      # lane-dense output
        compiler_params=pltpu.CompilerParams(
            dimension_semantics=("parallel",),        # megacore sharding on v7x
            vmem_limit_bytes=32 * 1024 * 1024,        # explicit, v5e/v6e/v7x safe
        ),
    )(x, w1_k, b1_k, w2_k, b2_k)

    # Restore the (B, 1) module output shape (row of probs -> column vector).
    return out_t.reshape(B, 1)


# ---------------------------------------------------------------------------
# Reference + init
# ---------------------------------------------------------------------------
def mlp_reference(x, w1, b1, w2, b2):
    # Pure-JAX reference with the same bf16 narrowing on the first matmul inputs.
    h = jnp.dot(x.astype(jnp.bfloat16), w1.T.astype(jnp.bfloat16),
                preferred_element_type=jnp.float32) + b1
    h = jnp.maximum(h, 0.0)
    z = h @ w2.T + b2
    return 1.0 / (1.0 + jnp.exp(-z))


def init_params(key, input_dim, hidden=32, out=1):
    # Deterministic synthetic init, PyTorch-Linear-like uniform bounds,
    # stored in torch layout: w (out_features, in_features), b (out_features,).
    k1, k2, k3, k4 = jax.random.split(key, 4)
    bound1 = 1.0 / (input_dim ** 0.5)
    bound2 = 1.0 / (hidden ** 0.5)
    w1 = jax.random.uniform(k1, (hidden, input_dim), jnp.float32, -bound1, bound1)
    b1 = jax.random.uniform(k2, (hidden,), jnp.float32, -bound1, bound1)
    w2 = jax.random.uniform(k3, (out, hidden), jnp.float32, -bound2, bound2)
    b2 = jax.random.uniform(k4, (out,), jnp.float32, -bound2, bound2)
    return w1, b1, w2, b2


if __name__ == "__main__":
    key = jax.random.PRNGKey(0)
    kx, kx2, kp = jax.random.split(key, 3)

    batch, input_dim = 8, 16
    x = jax.random.normal(kx, (batch, input_dim), jnp.float32)
    w1, b1, w2, b2 = init_params(kp, input_dim)

    fwd = jax.jit(mlp_forward, static_argnames=("max_batch_tile",))

    out = jax.block_until_ready(fwd(x, w1, b1, w2, b2))
    ref = mlp_reference(x, w1, b1, w2, b2)
    assert out.shape == (batch, 1)
    assert jnp.allclose(out, ref, atol=1e-2, rtol=1e-2), \
        f"max abs err = {float(jnp.max(jnp.abs(out - ref)))}"

    # Exercise the multi-block / partial-last-block path (batch not a multiple
    # of the tile) at a still-small size by capping the batch tile.
    batch2 = 600
    x2 = jax.random.normal(kx2, (batch2, input_dim), jnp.float32)
    out2 = jax.block_until_ready(fwd(x2, w1, b1, w2, b2, max_batch_tile=256))
    ref2 = mlp_reference(x2, w1, b1, w2, b2)
    assert out2.shape == (batch2, 1)
    assert jnp.allclose(out2, ref2, atol=1e-2, rtol=1e-2), \
        f"max abs err = {float(jnp.max(jnp.abs(out2 - ref2)))}"

    print("KERNEL_OK")
</pallas_src>

<mosaic_0001>
module attributes {stable_mosaic.version = 11 : i64} {
  func.func @mlp_kernel(%arg0: i32, %arg1: memref<8x16xf32, #tpu.memory_space<vmem>>, %arg2: memref<32x16xbf16, #tpu.memory_space<vmem>>, %arg3: memref<32x1xf32, #tpu.memory_space<vmem>>, %arg4: memref<32x1xf32, #tpu.memory_space<vmem>>, %arg5: memref<1xf32, #tpu.memory_space<smem>>, %arg6: memref<1x8xf32, #tpu.memory_space<vmem>>) attributes {dimension_semantics = [#tpu.dimension_semantics<parallel>], iteration_bounds = array<i64: 1>, scalar_prefetch = 0 : i64, scratch_operands = 0 : i64, tpu.core_type = #tpu.core_type<tc>, window_params = [{transform_indices = @transform_0, window_bounds = array<i64: 8, 16>}, {pipeline_mode = #tpu.pipeline_mode<synchronous>, transform_indices = @transform_1, window_bounds = array<i64: 32, 16>}, {pipeline_mode = #tpu.pipeline_mode<synchronous>, transform_indices = @transform_2, window_bounds = array<i64: 32, 1>}, {pipeline_mode = #tpu.pipeline_mode<synchronous>, transform_indices = @transform_3, window_bounds = array<i64: 32, 1>}, {transform_indices = @transform_4, window_bounds = array<i64: 1>}, {transform_indices = @transform_5, window_bounds = array<i64: 1, 8>}]} {
    %c0 = arith.constant 0 : index
    %c0_0 = arith.constant 0 : index
    %0 = vector.load %arg1[%c0, %c0_0] : memref<8x16xf32, #tpu.memory_space<vmem>>, vector<8x16xf32>
    %1 = arith.truncf %0 : vector<8x16xf32> to vector<8x16xbf16>
    %c0_1 = arith.constant 0 : index
    %c0_2 = arith.constant 0 : index
    %2 = vector.load %arg2[%c0_1, %c0_2] : memref<32x16xbf16, #tpu.memory_space<vmem>>, vector<32x16xbf16>
    %cst = arith.constant dense<0.000000e+00> : vector<32x8xf32>
    %3 = tpu.matmul %2, %1, %cst {dimension_numbers = #tpu.dot_dimension_numbers<[1], [1], [0], [0], [0, 0, 1, 0], [], []>} : vector<32x16xbf16>, vector<8x16xbf16>, vector<32x8xf32> -> vector<32x8xf32>
    %c0_3 = arith.constant 0 : index
    %c0_4 = arith.constant 0 : index
    %4 = vector.load %arg3[%c0_3, %c0_4] : memref<32x1xf32, #tpu.memory_space<vmem>>, vector<32x1xf32>
    %5 = vector.broadcast %4 : vector<32x1xf32> to vector<32x8xf32>
    %6 = arith.addf %3, %5 : vector<32x8xf32>
    %cst_5 = arith.constant 0.000000e+00 : f32
    %7 = vector.broadcast %cst_5 : f32 to vector<32x8xf32>
    %8 = arith.maximumf %6, %7 : vector<32x8xf32>
    %c0_6 = arith.constant 0 : index
    %c0_7 = arith.constant 0 : index
    %9 = vector.load %arg4[%c0_6, %c0_7] : memref<32x1xf32, #tpu.memory_space<vmem>>, vector<32x1xf32>
    %10 = vector.broadcast %9 : vector<32x1xf32> to vector<32x8xf32>
    %11 = arith.mulf %8, %10 : vector<32x8xf32>
    %cst_8 = arith.constant dense<0.000000e+00> : vector<8xf32>
    %12 = vector.multi_reduction <add>, %11, %cst_8 [0] : vector<32x8xf32> to vector<8xf32>
    %13 = vector.shape_cast %12 : vector<8xf32> to vector<1x8xf32>
    %c0_9 = arith.constant 0 : index
    %14 = memref.load %arg5[%c0_9] : memref<1xf32, #tpu.memory_space<smem>>
    %15 = vector.broadcast %14 : f32 to vector<1x8xf32>
    %16 = arith.addf %13, %15 : vector<1x8xf32>
    %cst_10 = arith.constant 0.000000e+00 : f32
    %17 = vector.broadcast %cst_10 : f32 to vector<1x8xf32>
    %18 = arith.subf %17, %16 : vector<1x8xf32>
    %19 = math.exp %18 : vector<1x8xf32>
    %cst_11 = arith.constant 1.000000e+00 : f32
    %20 = vector.broadcast %cst_11 : f32 to vector<1x8xf32>
    %21 = arith.addf %20, %19 : vector<1x8xf32>
    %cst_12 = arith.constant 1.000000e+00 : f32
    %22 = vector.broadcast %cst_12 : f32 to vector<1x8xf32>
    %23 = arith.divf %22, %21 : vector<1x8xf32>
    %c0_13 = arith.constant 0 : index
    %c0_14 = arith.constant 0 : index
    %24 = vector.load %arg6[%c0_13, %c0_14] : memref<1x8xf32, #tpu.memory_space<vmem>>, vector<1x8xf32>
    tpu.vector_store %arg6[%c0_13, %c0_14], %23 {strides = array<i32>} : memref<1x8xf32, #tpu.memory_space<vmem>>, vector<1x8xf32>,
    return
  }
  func.func @transform_0(%arg0: i32) -> (i32, i32) {
    %c0_i32 = arith.constant 0 : i32
    %c0_i32_0 = arith.constant 0 : i32
    return %arg0, %c0_i32 : i32, i32
  }
  func.func @transform_1(%arg0: i32) -> (i32, i32) {
    %c0_i32 = arith.constant 0 : i32
    %c0_i32_0 = arith.constant 0 : i32
    %c0_i32_1 = arith.constant 0 : i32
    return %c0_i32, %c0_i32_0 : i32, i32
  }
  func.func @transform_2(%arg0: i32) -> (i32, i32) {
    %c0_i32 = arith.constant 0 : i32
    %c0_i32_0 = arith.constant 0 : i32
    %c0_i32_1 = arith.constant 0 : i32
    return %c0_i32, %c0_i32_0 : i32, i32
  }
  func.func @transform_3(%arg0: i32) -> (i32, i32) {
    %c0_i32 = arith.constant 0 : i32
    %c0_i32_0 = arith.constant 0 : i32
    %c0_i32_1 = arith.constant 0 : i32
    return %c0_i32, %c0_i32_0 : i32, i32
  }
  func.func @transform_4(%arg0: i32) -> i32 {
    %c0_i32 = arith.constant 0 : i32
    %c0_i32_0 = arith.constant 0 : i32
    return %c0_i32 : i32
  }
  func.func @transform_5(%arg0: i32) -> (i32, i32) {
    %c0_i32 = arith.constant 0 : i32
    %c0_i32_0 = arith.constant 0 : i32
    return %c0_i32, %arg0 : i32, i32
  }
}

</mosaic_0001>

<llo_original>
// kernel: mlp_forward.1
$region0: #{mlp_forward.1}
  #allocation0 [shape = 'u32[]', space=smem, size = 0x4, offset = 0x4, fixed_abs, tag = 'smem constant byte address 0x4 - core index']
  #allocation1 [shape = 'u32[144,128]{1,0:T(1,128)}', space=vmem, size = 0x12000, scoped, tag = 'internal scratch']
  #allocation2 [shape = 'f32[1]{0:T(128)S(6)}', space=smem, size = 0x200, scoped, tag = 'scoped memory for mlp_forward.1']
  %s0 = inlined_call_operand.vmem [shape: f32[8,16], index: 0, kind: input, shape index: {}]
  %s1 = inlined_call_operand.vmem [shape: bf16[32,16], index: 1, kind: input, shape index: {}]
  %s2 = inlined_call_operand.vmem [shape: f32[32,1], index: 2, kind: input, shape index: {}]
  %s3 = inlined_call_operand.vmem [shape: f32[32,1], index: 3, kind: input, shape index: {}]
  %s4 = inlined_call_operand.<no memory space> [shape: f32[1], index: 4, kind: input, shape index: {}]
  %s5 = inlined_call_operand.hbm [shape: f32[1,8], index: 5, kind: output, shape index: {}]
  %s6 = sld [smem:[#allocation0]]
  $region30: #{mlp_forward.1} parent=0
    _
  %s8 = ssub.s32 1, %s6
  %s9 = scalar_select 0, %s8, %s6
  %10 = sst [smem:[#allocation2]] %s4
  $region1: #{mlp_forward.1} parent=0
    #allocation3 [shape = 'u8[512]{0}', space=vmem, size = 0x400, scoped, tag = 'output window, operand 0, single buffered']
    #allocation4 [shape = 's32[1]{0}', space=sflag, size = 0x4, scoped, tag = 'scoped memory for mlp_forward.1']
    %11 = vsyncpa [#allocation4], 0
    // Predicated region
    $region2: #{mlp_forward.1} parent=1 // pred_check
      _
    $region3: #{mlp_forward.1} parent=1 // pred_check_branch
      %13 = sbr.rel (0) target = $region5
    $region4: #{mlp_forward.1} parent=1 // pred_region
      _
    $region5: #{mlp_forward.1} parent=1 // pred_fallthru
      _
    // Predicated region
    $region6: #{mlp_forward.1} parent=1 // pred_check
      _
    $region7: #{mlp_forward.1} parent=1 // pred_check_branch
      %15 = sbr.rel (0) target = $region9
    $region8: #{mlp_forward.1} parent=1 // pred_region
      _
    $region9: #{mlp_forward.1} parent=1 // pred_fallthru
      _
    // Predicated region
    $region10: #{mlp_forward.1} parent=1 // pred_check
      _
    $region11: #{mlp_forward.1} parent=1 // pred_check_branch
      %17 = sbr.rel (0) target = $region13
    $region12: #{mlp_forward.1} parent=1 // pred_region
      _
    $region13: #{mlp_forward.1} parent=1 // pred_fallthru
      _
    // Predicated region
    $region14: #{mlp_forward.1} parent=1 // pred_check
      _
    $region15: #{mlp_forward.1} parent=1 // pred_check_branch
      %19 = sbr.rel (0) target = $region17
    $region16: #{mlp_forward.1} parent=1 // pred_region
      _
    $region17: #{mlp_forward.1} parent=1 // pred_fallthru
      _
    // Predicated region
    $region18: #{mlp_forward.1} parent=1 // pred_check
      _
    $region19: #{mlp_forward.1} parent=1 // pred_check_branch
      %21 = sbr.rel (0) target = $region21
    $region20: #{mlp_forward.1} parent=1 // pred_region
      _
    $region21: #{mlp_forward.1} parent=1 // pred_fallthru
      _
    %v23 = vld [vmem:[%s0] sm:$0xff]
    %v24 = vpack.c.bf16 %v23, %v23
    %v25 = vld [vmem:[%s1] sm:$0xf]
    %v26 = vld [vmem:[%s1 + $0x4] sm:$0xf]
    %v27 = vld [vmem:[%s1 + $0x8] sm:$0xf]
    %v28 = vld [vmem:[%s1 + $0xc] sm:$0xf]
    %v29 = vld [vmem:[%s2] sm:$0xff]
    %v30 = vld [vmem:[%s2 + $0x8] sm:$0xff]
    %v31 = vld [vmem:[%s2 + $0x10] sm:$0xff]
    %v32 = vld [vmem:[%s2 + $0x18] sm:$0xff]
    %34 = vset.pattern.permute.xlu0 0
    %35 = vperm.xlu0 %34, %v29
    %v36 = vpop.permute.xlu0 %35
    %39 = vset.pattern.permute.xlu0 0
    %40 = vperm.xlu0 %39, %v30
    %v41 = vpop.permute.xlu0 %40
    %44 = vset.pattern.permute.xlu0 0
    %45 = vperm.xlu0 %44, %v31
    %v46 = vpop.permute.xlu0 %45
    %49 = vset.pattern.permute.xlu0 0
    %50 = vperm.xlu0 %49, %v32
    %v51 = vpop.permute.xlu0 %50
    %v57 = vunpack.c.l.b16 %v25
    %v58 = vunpack.c.l.b16 %v26
    %v59 = vunpack.c.l.b16 %v27
    %v60 = vunpack.c.l.b16 %v28
    %v61 = vpack.c.b16 %v58, %v57
    %v62 = vpack.c.b16 %v60, %v59
    %vm63 = vcmask 130048
    %v65 = vsel %vm63, %v61, 0
    %v68 = vsel %vm63, %v62, 0
    %v71 = vsel %vm63, %v24, 0
    %73 = vmatprep.subr.bf16.mxu0 0
    %74 = vmatpush1.bf16.xpose.msra.mxu0 %v71
    %75 = vmatprep.subr.bf16.mxu0 0
    %76 = vmatpush1.bf16.xpose.msra.mxu0 0
    %77 = vmatprep.subr.bf16.mxu0 0
    %78 = vmatpush1.bf16.xpose.msra.mxu0 0
    %79 = vmatprep.subr.bf16.mxu0 0
    %80 = vmatpush1.bf16.xpose.msra.mxu0 0
    %81 = vmatprep.subr.bf16.mxu0 0
    %82 = vmatpush1.bf16.xpose.msra.mxu0 0
    %83 = vmatprep.subr.bf16.mxu0 0
    %84 = vmatpush1.bf16.xpose.msra.mxu0 0
    %85 = vmatprep.subr.bf16.mxu0 0
    %86 = vmatpush1.bf16.xpose.msra.mxu0 0
    %87 = vmatprep.subr.bf16.mxu0 0
    %88 = vmatpush1.bf16.xpose.msra.mxu0 0
    %89 = vmatprep.subr.bf16.mxu0 0
    %90 = vmatpush1.bf16.xpose.msra.mxu0 0
    %91 = vmatprep.subr.bf16.mxu0 0
    %92 = vmatpush1.bf16.xpose.msra.mxu0 0
    %93 = vmatprep.subr.bf16.mxu0 0
    %94 = vmatpush1.bf16.xpose.msra.mxu0 0
    %95 = vmatprep.subr.bf16.mxu0 0
    %96 = vmatpush1.bf16.xpose.msra.mxu0 0
    %97 = vmatprep.subr.bf16.mxu0 0
    %98 = vmatpush1.bf16.xpose.msra.mxu0 0
    %99 = vmatprep.subr.bf16.mxu0 0
    %100 = vmatpush1.bf16.xpose.msra.mxu0 0
    %101 = vmatprep.subr.bf16.mxu0 0
    %102 = vmatpush1.bf16.xpose.msra.mxu0 0
    %103 = vmatprep.subr.bf16.mxu0 0
    %104 = vmatpush1.bf16.xpose.msra.mxu0 0
    %105 = vmatprep.mubr.bf16.mxu0 0
    %106 = vmatmul.mubr.bf16.gmra.mrb[0].mxu0 %v65
    %v107 = vpop.f32.mrb[0].mxu0
    %v108 = vadd.f32 %v36, %v107
    %v109 = vpop.f32.mrb[0].mxu0
    %v110 = vpop.f32.mrb[0].mxu0
    %v111 = vadd.f32 %v41, %v110
    %v112 = vpop.f32.mrb[0].mxu0
    %113 = vmatprep.mubr.bf16.mxu0 0
    %114 = vmatmul.mubr.bf16.gmra.mrb[0].mxu0 %v68
    %v115 = vpop.f32.mrb[0].mxu0
    %v116 = vadd.f32 %v46, %v115
    %v117 = vpop.f32.mrb[0].mxu0
    %v118 = vpop.f32.mrb[0].mxu0
    %v119 = vadd.f32 %v51, %v118
    %v120 = vpop.f32.mrb[0].mxu0
    %121 = vdwg.mxu0
    %v122 = vmax.f32 %v108, 0.0
    %v123 = vmax.f32 %v111, 0.0
    %v124 = vmax.f32 %v116, 0.0
    %v125 = vmax.f32 %v119, 0.0
    %v126 = vld [vmem:[%s3] sm:$0xff]
    %v127 = vld [vmem:[%s3 + $0x8] sm:$0xff]
    %v128 = vld [vmem:[%s3 + $0x10] sm:$0xff]
    %v129 = vld [vmem:[%s3 + $0x18] sm:$0xff]
    %131 = vset.pattern.permute.xlu0 0
    %132 = vperm.xlu0 %131, %v126
    %v133 = vpop.permute.xlu0 %132
    %136 = vset.pattern.permute.xlu0 0
    %137 = vperm.xlu0 %136, %v127
    %v138 = vpop.permute.xlu0 %137
    %141 = vset.pattern.permute.xlu0 0
    %142 = vperm.xlu0 %141, %v128
    %v143 = vpop.permute.xlu0 %142
    %146 = vset.pattern.permute.xlu0 0
    %147 = vperm.xlu0 %146, %v129
    %v148 = vpop.permute.xlu0 %147
    %v150 = vmul.f32 %v122, %v133
    %v151 = vmul.f32 %v123, %v138
    %v152 = vmul.f32 %v124, %v143
    %v153 = vmul.f32 %v125, %v148
    %vm154 = vcmask 64512
    %v155 = vsel %vm154, %v150, 0.0
    %v156 = vsel %vm154, %v151, 0.0
    %v157 = vadd.f32 %v155, %v156
    %v158 = vsel %vm154, %v152, 0.0
    %v159 = vadd.f32 %v157, %v158
    %v160 = vsel %vm154, %v153, 0.0
    %v161 = vadd.f32 %v159, %v160
    %v162 = vrot.slane %v161, 4
    %v163 = vadd.f32 %v161, %v162
    %v164 = vrot.slane %v163, 2
    %v165 = vadd.f32 %v163, %v164
    %v166 = vrot.slane %v165, 1
    %v167 = vadd.f32 %v165, %v166
    %s168 = sld [smem:[#allocation2]]
    %v169 = vstv %s168
    %v170 = vadd.f32 %v167, %v169
    %v171 = vsub.f32 0.0, %v170
    %v172 = vmul.f32 %v171, 1.442695
    %v173 = vpow.pop %v172
    %v174 = vadd.f32 %v173, 1.0
    %v175 = vrcp.pop %v174
    %v176 = vmul.f32 1.0, %v175
    %vm177 = vcmask 57344
    %178 = vst.msk [vmem:[#allocation3] sm:$0x1] %vm177, %v176
    // Predicated region
    $region22: #{mlp_forward.1} parent=1 // pred_check
      _
    $region23: #{mlp_forward.1} parent=1 // pred_check_branch
      %180 = sbr.rel (0) target = $region25
    $region24: #{mlp_forward.1} parent=1 // pred_region
      %s182 = ssub.s32 16, 16
      %183 = vsyncadd [#allocation4], %s182
      %s185 = sshll.u32 [#allocation3], 4
      %s186 = int_to_ptr.vmem [resolvable:$true] %s185
      %188 = dma.vmem_to_hbm [thread:$0]  %s186, 16, %s5, [#allocation4]
    $region25: #{mlp_forward.1} parent=1 // pred_fallthru
      _
    // Predicated region
    $region26: #{mlp_forward.1} parent=1 // pred_check
      _
    $region27: #{mlp_forward.1} parent=1 // pred_check_branch
      %190 = sbr.rel (0) target = $region29
    $region28: #{mlp_forward.1} parent=1 // pred_region
      %191 = dma.done [#allocation4], 16
    $region29: #{mlp_forward.1} parent=1 // pred_fallthru
      _
    %192 = vsyncpa [#allocation4], 1

</llo_original>
